<compile_context>
chip_gen: v5e
topology: v5e:2x2
jax: 0.10.0
libtpu: 0.0.40
codegen_flags: <defaults>
</compile_context>

<pallas_src>
import functools

import jax
import jax.numpy as jnp
from jax.experimental import pallas as pl
from jax.experimental.pallas import tpu as pltpu


def fused_conv_bn_kernel(patches_ref, w_ref, bias_ref, gamma_ref, beta_ref, o_ref,
                         *, n, eps, count):
    """Conv (im2col matmul) + train-mode BatchNorm2d + Identity, whole batch in VMEM.

    patches_ref: (N, K2C, P)        im2col patches, P = Ho*Wo, K2C = Cin*KH*KW
    w_ref:       (Cout, K2C)
    bias/gamma/beta_ref: (Cout, 1)  float32
    o_ref:       (N, Cout, P)
    """
    w = w_ref[...]
    b = bias_ref[...]

    # Conv: one MXU matmul per batch element, f32 accumulation, results held in VMEM.
    convs = []
    s = jnp.zeros(b.shape, jnp.float32)
    for i in range(n):                                      # n is small & static
        c = jnp.dot(w, patches_ref[i], preferred_element_type=jnp.float32) + b
        convs.append(c)                                     # (Cout, P)
        s = s + jnp.sum(c, axis=1, keepdims=True)

    inv_count = 1.0 / count
    mean = s * inv_count                                    # (Cout, 1)

    # Two-pass variance (numerically robust).
    v = jnp.zeros_like(s)
    for c in convs:
        d = c - mean
        v = v + jnp.sum(d * d, axis=1, keepdims=True)
    var = v * inv_count                                     # biased var (BN train mode)

    inv_std = jax.lax.rsqrt(var + eps)                      # EUP rsqrt
    scale = gamma_ref[...] * inv_std                        # (Cout, 1)
    shift = beta_ref[...] - mean * scale

    for i, c in enumerate(convs):
        o_ref[i] = (c * scale + shift).astype(o_ref.dtype)


def conv_block_2d(x_nchw, weight_oihw, bias, gamma, beta, *,
                  stride=1, padding=0, dilation=1, eps=1e-5):
    """NCHW in -> NCHW out.  Conv2d + BatchNorm2d(train-mode batch stats) + Identity."""
    N, Cin, H, W = x_nchw.shape
    Cout, _, KH, KW = weight_oihw.shape
    sh, sw = (stride, stride) if isinstance(stride, int) else stride
    ph, pw = (padding, padding) if isinstance(padding, int) else padding
    dh, dw = (dilation, dilation) if isinstance(dilation, int) else dilation
    Ho = (H + 2 * ph - dh * (KH - 1) - 1) // sh + 1
    Wo = (W + 2 * pw - dw * (KW - 1) - 1) // sw + 1
    K2C = Cin * KH * KW
    P = Ho * Wo

    # im2col once in the wrapper (single fused XLA op).  Feature ordering of the
    # patches is (ci, kh, kw), matching weight.reshape(Cout, Cin*KH*KW).
    patches = jax.lax.conv_general_dilated_patches(
        x_nchw, filter_shape=(KH, KW), window_strides=(sh, sw),
        padding=[(ph, ph), (pw, pw)], rhs_dilation=(dh, dw),
        dimension_numbers=("NCHW", "OIHW", "NCHW"))          # (N, K2C, Ho, Wo)
    patches = patches.reshape(N, K2C, P)

    w_mat = weight_oihw.reshape(Cout, K2C)
    b = bias.astype(jnp.float32).reshape(Cout, 1)
    g = gamma.astype(jnp.float32).reshape(Cout, 1)
    bt = beta.astype(jnp.float32).reshape(Cout, 1)

    kernel = functools.partial(fused_conv_bn_kernel, n=N, eps=eps, count=float(N * P))

    flops = 2 * N * P * K2C * Cout + 8 * N * Cout * P
    bytes_accessed = (patches.size * patches.dtype.itemsize
                      + w_mat.size * w_mat.dtype.itemsize + 3 * Cout * 4
                      + N * Cout * P * x_nchw.dtype.itemsize)

    out = pl.pallas_call(
        kernel,
        out_shape=jax.ShapeDtypeStruct((N, Cout, P), x_nchw.dtype),
        grid=(1,),                       # single fused step: whole batch in VMEM
        in_specs=[pl.BlockSpec((N, K2C, P), lambda i: (0, 0, 0)),
                  pl.BlockSpec((Cout, K2C), lambda i: (0, 0)),
                  pl.BlockSpec((Cout, 1), lambda i: (0, 0)),
                  pl.BlockSpec((Cout, 1), lambda i: (0, 0)),
                  pl.BlockSpec((Cout, 1), lambda i: (0, 0))],
        out_specs=pl.BlockSpec((N, Cout, P), lambda i: (0, 0, 0)),
        compiler_params=pltpu.CompilerParams(
            dimension_semantics=("arbitrary",)),  # one step: nothing to shard on v7x
        cost_estimate=pl.CostEstimate(flops=flops, transcendentals=Cout,
                                      bytes_accessed=bytes_accessed),
    )(patches, w_mat, b, g, bt)

    # TODO(synk): PyTorch BatchNorm2d also updates running_mean/running_var in train
    # mode; those side-effect buffers are not produced here (forward output only).
    # TODO(synk): Dropout (dropout > 0) not implemented; module default dropout=0.
    # Flat Ho*Wo -> (Ho, Wo): metadata-level split of the slab the kernel already
    # wrote in NCHW order.
    return out.reshape(N, Cout, Ho, Wo)


if __name__ == "__main__":
    # Module defaults: in_channels=1, out_channels=8, kernel_size=3, stride=1,
    # padding=0, dilation=1, dropout=0, activation=None (Identity).
    N, Cin, H, W = 2, 1, 16, 16
    Cout, K = 8, 3

    key = jax.random.PRNGKey(0)
    kx, kw_, kb = jax.random.split(key, 3)

    x = jax.random.normal(kx, (N, Cin, H, W), dtype=jnp.float32)

    fan_in = Cin * K * K
    bound = 1.0 / (fan_in ** 0.5)
    weight = jax.random.uniform(kw_, (Cout, Cin, K, K), jnp.float32, -bound, bound)
    bias = jax.random.uniform(kb, (Cout,), jnp.float32, -bound, bound)
    gamma = jnp.ones((Cout,), jnp.float32)     # PyTorch BatchNorm2d defaults
    beta = jnp.zeros((Cout,), jnp.float32)

    fwd = jax.jit(conv_block_2d)
    out = fwd(x, weight, bias, gamma, beta)
    out = jax.block_until_ready(out)

    # Pure-JAX reference (Conv2d + bias, then train-mode BatchNorm2d, Identity act).
    ref_conv = jax.lax.conv_general_dilated(
        x, weight, window_strides=(1, 1), padding="VALID",
        dimension_numbers=("NCHW", "OIHW", "NCHW"),
    ) + bias.reshape(1, -1, 1, 1)
    m = ref_conv.mean(axis=(0, 2, 3), keepdims=True)
    v = ((ref_conv - m) ** 2).mean(axis=(0, 2, 3), keepdims=True)
    ref = (ref_conv - m) / jnp.sqrt(v + 1e-5) * gamma.reshape(1, -1, 1, 1) \
        + beta.reshape(1, -1, 1, 1)

    assert out.shape == (N, Cout, H - K + 1, W - K + 1), out.shape
    assert jnp.allclose(out, ref, atol=2e-4, rtol=2e-4), float(jnp.abs(out - ref).max())
    print("KERNEL_OK")
</pallas_src>

<mosaic_0001>
module attributes {stable_mosaic.version = 11 : i64} {
  func.func @fused_conv_bn_kernel(%arg0: i32, %arg1: memref<2x9x196xf32, #tpu.memory_space<vmem>>, %arg2: memref<8x9xf32, #tpu.memory_space<vmem>>, %arg3: memref<8x1xf32, #tpu.memory_space<vmem>>, %arg4: memref<8x1xf32, #tpu.memory_space<vmem>>, %arg5: memref<8x1xf32, #tpu.memory_space<vmem>>, %arg6: memref<2x8x196xf32, #tpu.memory_space<vmem>>) attributes {dimension_semantics = [#tpu.dimension_semantics<arbitrary>], iteration_bounds = array<i64: 1>, scalar_prefetch = 0 : i64, scratch_operands = 0 : i64, tpu.core_type = #tpu.core_type<tc>, window_params = [{pipeline_mode = #tpu.pipeline_mode<synchronous>, transform_indices = @transform_0, window_bounds = array<i64: 2, 9, 196>}, {pipeline_mode = #tpu.pipeline_mode<synchronous>, transform_indices = @transform_1, window_bounds = array<i64: 8, 9>}, {pipeline_mode = #tpu.pipeline_mode<synchronous>, transform_indices = @transform_2, window_bounds = array<i64: 8, 1>}, {pipeline_mode = #tpu.pipeline_mode<synchronous>, transform_indices = @transform_3, window_bounds = array<i64: 8, 1>}, {pipeline_mode = #tpu.pipeline_mode<synchronous>, transform_indices = @transform_4, window_bounds = array<i64: 8, 1>}, {pipeline_mode = #tpu.pipeline_mode<synchronous>, transform_indices = @transform_5, window_bounds = array<i64: 2, 8, 196>}]} {
    %c0 = arith.constant 0 : index
    %c0_0 = arith.constant 0 : index
    %0 = vector.load %arg2[%c0, %c0_0] : memref<8x9xf32, #tpu.memory_space<vmem>>, vector<8x9xf32>
    %c0_1 = arith.constant 0 : index
    %c0_2 = arith.constant 0 : index
    %1 = vector.load %arg3[%c0_1, %c0_2] : memref<8x1xf32, #tpu.memory_space<vmem>>, vector<8x1xf32>
    %cst = arith.constant 0.000000e+00 : f32
    %2 = vector.broadcast %cst : f32 to vector<8x1xf32>
    %c0_3 = arith.constant 0 : index
    %c0_4 = arith.constant 0 : index
    %c0_5 = arith.constant 0 : index
    %3 = vector.load %arg1[%c0_3, %c0_4, %c0_5] : memref<2x9x196xf32, #tpu.memory_space<vmem>>, vector<1x9x196xf32>
    %4 = vector.shape_cast %3 : vector<1x9x196xf32> to vector<9x196xf32>
    %cst_6 = arith.constant dense<0.000000e+00> : vector<8x196xf32>
    %5 = tpu.matmul %0, %4, %cst_6 {dimension_numbers = #tpu.dot_dimension_numbers<[1], [0], [0], [1], [0, 0, 1, 1], [], []>} : vector<8x9xf32>, vector<9x196xf32>, vector<8x196xf32> -> vector<8x196xf32>
    %6 = vector.broadcast %1 : vector<8x1xf32> to vector<8x196xf32>
    %7 = arith.addf %5, %6 : vector<8x196xf32>
    %cst_7 = arith.constant dense<0.000000e+00> : vector<8xf32>
    %8 = vector.multi_reduction <add>, %7, %cst_7 [1] : vector<8x196xf32> to vector<8xf32>
    %9 = vector.shape_cast %8 : vector<8xf32> to vector<8x1xf32>
    %10 = arith.addf %2, %9 : vector<8x1xf32>
    %c1 = arith.constant 1 : index
    %c0_8 = arith.constant 0 : index
    %c0_9 = arith.constant 0 : index
    %11 = vector.load %arg1[%c1, %c0_8, %c0_9] : memref<2x9x196xf32, #tpu.memory_space<vmem>>, vector<1x9x196xf32>
    %12 = vector.shape_cast %11 : vector<1x9x196xf32> to vector<9x196xf32>
    %cst_10 = arith.constant dense<0.000000e+00> : vector<8x196xf32>
    %13 = tpu.matmul %0, %12, %cst_10 {dimension_numbers = #tpu.dot_dimension_numbers<[1], [0], [0], [1], [0, 0, 1, 1], [], []>} : vector<8x9xf32>, vector<9x196xf32>, vector<8x196xf32> -> vector<8x196xf32>
    %14 = vector.broadcast %1 : vector<8x1xf32> to vector<8x196xf32>
    %15 = arith.addf %13, %14 : vector<8x196xf32>
    %cst_11 = arith.constant dense<0.000000e+00> : vector<8xf32>
    %16 = vector.multi_reduction <add>, %15, %cst_11 [1] : vector<8x196xf32> to vector<8xf32>
    %17 = vector.shape_cast %16 : vector<8xf32> to vector<8x1xf32>
    %18 = arith.addf %10, %17 : vector<8x1xf32>
    %cst_12 = arith.constant 0.00255102036 : f32
    %19 = vector.broadcast %cst_12 : f32 to vector<8x1xf32>
    %20 = arith.mulf %18, %19 : vector<8x1xf32>
    %cst_13 = arith.constant 0.000000e+00 : f32
    %21 = vector.broadcast %cst_13 : f32 to vector<8x1xf32>
    %22 = vector.broadcast %20 : vector<8x1xf32> to vector<8x196xf32>
    %23 = arith.subf %7, %22 : vector<8x196xf32>
    %24 = arith.mulf %23, %23 : vector<8x196xf32>
    %cst_14 = arith.constant dense<0.000000e+00> : vector<8xf32>
    %25 = vector.multi_reduction <add>, %24, %cst_14 [1] : vector<8x196xf32> to vector<8xf32>
    %26 = vector.shape_cast %25 : vector<8xf32> to vector<8x1xf32>
    %27 = arith.addf %21, %26 : vector<8x1xf32>
    %28 = vector.broadcast %20 : vector<8x1xf32> to vector<8x196xf32>
    %29 = arith.subf %15, %28 : vector<8x196xf32>
    %30 = arith.mulf %29, %29 : vector<8x196xf32>
    %cst_15 = arith.constant dense<0.000000e+00> : vector<8xf32>
    %31 = vector.multi_reduction <add>, %30, %cst_15 [1] : vector<8x196xf32> to vector<8xf32>
    %32 = vector.shape_cast %31 : vector<8xf32> to vector<8x1xf32>
    %33 = arith.addf %27, %32 : vector<8x1xf32>
    %cst_16 = arith.constant 0.00255102036 : f32
    %34 = vector.broadcast %cst_16 : f32 to vector<8x1xf32>
    %35 = arith.mulf %33, %34 : vector<8x1xf32>
    %cst_17 = arith.constant 9.99999974E-6 : f32
    %36 = vector.broadcast %cst_17 : f32 to vector<8x1xf32>
    %37 = arith.addf %35, %36 : vector<8x1xf32>
    %38 = math.rsqrt %37 : vector<8x1xf32>
    %c0_18 = arith.constant 0 : index
    %c0_19 = arith.constant 0 : index
    %39 = vector.load %arg4[%c0_18, %c0_19] : memref<8x1xf32, #tpu.memory_space<vmem>>, vector<8x1xf32>
    %40 = arith.mulf %39, %38 : vector<8x1xf32>
    %c0_20 = arith.constant 0 : index
    %c0_21 = arith.constant 0 : index
    %41 = vector.load %arg5[%c0_20, %c0_21] : memref<8x1xf32, #tpu.memory_space<vmem>>, vector<8x1xf32>
    %42 = arith.mulf %20, %40 : vector<8x1xf32>
    %43 = arith.subf %41, %42 : vector<8x1xf32>
    %44 = vector.broadcast %40 : vector<8x1xf32> to vector<8x196xf32>
    %45 = arith.mulf %7, %44 : vector<8x196xf32>
    %46 = vector.broadcast %43 : vector<8x1xf32> to vector<8x196xf32>
    %47 = arith.addf %45, %46 : vector<8x196xf32>
    %c0_22 = arith.constant 0 : index
    %c0_23 = arith.constant 0 : index
    %c0_24 = arith.constant 0 : index
    %48 = vector.load %arg6[%c0_22, %c0_23, %c0_24] : memref<2x8x196xf32, #tpu.memory_space<vmem>>, vector<1x8x196xf32>
    %49 = vector.shape_cast %48 : vector<1x8x196xf32> to vector<8x196xf32>
    %50 = vector.shape_cast %47 : vector<8x196xf32> to vector<1x8x196xf32>
    tpu.vector_store %arg6[%c0_22, %c0_23, %c0_24], %50 {strides = array<i32>} : memref<2x8x196xf32, #tpu.memory_space<vmem>>, vector<1x8x196xf32>,
    %51 = vector.broadcast %40 : vector<8x1xf32> to vector<8x196xf32>
    %52 = arith.mulf %15, %51 : vector<8x196xf32>
    %53 = vector.broadcast %43 : vector<8x1xf32> to vector<8x196xf32>
    %54 = arith.addf %52, %53 : vector<8x196xf32>
    %c1_25 = arith.constant 1 : index
    %c0_26 = arith.constant 0 : index
    %c0_27 = arith.constant 0 : index
    %55 = vector.load %arg6[%c1_25, %c0_26, %c0_27] : memref<2x8x196xf32, #tpu.memory_space<vmem>>, vector<1x8x196xf32>
    %56 = vector.shape_cast %55 : vector<1x8x196xf32> to vector<8x196xf32>
    %57 = vector.shape_cast %54 : vector<8x196xf32> to vector<1x8x196xf32>
    tpu.vector_store %arg6[%c1_25, %c0_26, %c0_27], %57 {strides = array<i32>} : memref<2x8x196xf32, #tpu.memory_space<vmem>>, vector<1x8x196xf32>,
    return
  }
  func.func @transform_0(%arg0: i32) -> (i32, i32, i32) {
    %c0_i32 = arith.constant 0 : i32
    %c0_i32_0 = arith.constant 0 : i32
    %c0_i32_1 = arith.constant 0 : i32
    %c0_i32_2 = arith.constant 0 : i32
    return %c0_i32, %c0_i32_0, %c0_i32_1 : i32, i32, i32
  }
  func.func @transform_1(%arg0: i32) -> (i32, i32) {
    %c0_i32 = arith.constant 0 : i32
    %c0_i32_0 = arith.constant 0 : i32
    %c0_i32_1 = arith.constant 0 : i32
    return %c0_i32, %c0_i32_0 : i32, i32
  }
  func.func @transform_2(%arg0: i32) -> (i32, i32) {
    %c0_i32 = arith.constant 0 : i32
    %c0_i32_0 = arith.constant 0 : i32
    %c0_i32_1 = arith.constant 0 : i32
    return %c0_i32, %c0_i32_0 : i32, i32
  }
  func.func @transform_3(%arg0: i32) -> (i32, i32) {
    %c0_i32 = arith.constant 0 : i32
    %c0_i32_0 = arith.constant 0 : i32
    %c0_i32_1 = arith.constant 0 : i32
    return %c0_i32, %c0_i32_0 : i32, i32
  }
  func.func @transform_4(%arg0: i32) -> (i32, i32) {
    %c0_i32 = arith.constant 0 : i32
    %c0_i32_0 = arith.constant 0 : i32
    %c0_i32_1 = arith.constant 0 : i32
    return %c0_i32, %c0_i32_0 : i32, i32
  }
  func.func @transform_5(%arg0: i32) -> (i32, i32, i32) {
    %c0_i32 = arith.constant 0 : i32
    %c0_i32_0 = arith.constant 0 : i32
    %c0_i32_1 = arith.constant 0 : i32
    %c0_i32_2 = arith.constant 0 : i32
    return %c0_i32, %c0_i32_0, %c0_i32_1 : i32, i32, i32
  }
}

</mosaic_0001>

<llo_original>
// kernel: conv_block_2d.1
$region0: #{conv_block_2d.1}
  #allocation0 [shape = 'u32[]', space=smem, size = 0x4, offset = 0x4, fixed_abs, tag = 'smem constant byte address 0x4 - core index']
  #allocation1 [shape = 'u32[72,128]{1,0:T(1,128)}', space=vmem, size = 0x9000, scoped, tag = 'internal scratch']
  %s0 = inlined_call_operand.vmem [shape: f32[2,9,196], index: 0, kind: input, shape index: {}]
  %s1 = inlined_call_operand.vmem [shape: f32[8,9], index: 1, kind: input, shape index: {}]
  %s2 = inlined_call_operand.vmem [shape: f32[8,1], index: 2, kind: input, shape index: {}]
  %s3 = inlined_call_operand.vmem [shape: f32[8,1], index: 3, kind: input, shape index: {}]
  %s4 = inlined_call_operand.vmem [shape: f32[8,1], index: 4, kind: input, shape index: {}]
  %s5 = inlined_call_operand.vmem [shape: f32[2,8,196], index: 5, kind: output, shape index: {}]
  %s6 = sld [smem:[#allocation0]]
  $region30: #{conv_block_2d.1} parent=0
    _
  %s8 = ssub.s32 1, %s6
  %s9 = scalar_select 0, %s8, %s6
  // Predicated region
  $region2: #{conv_block_2d.1} parent=0 // pred_check
    _
  $region3: #{conv_block_2d.1} parent=0 // pred_check_branch
    %11 = sbr.rel (0) target = $region5
  $region4: #{conv_block_2d.1} parent=0 // pred_region
    _
  $region5: #{conv_block_2d.1} parent=0 // pred_fallthru
    _
  // Predicated region
  $region6: #{conv_block_2d.1} parent=0 // pred_check
    _
  $region7: #{conv_block_2d.1} parent=0 // pred_check_branch
    %13 = sbr.rel (0) target = $region9
  $region8: #{conv_block_2d.1} parent=0 // pred_region
    _
  $region9: #{conv_block_2d.1} parent=0 // pred_fallthru
    _
  // Predicated region
  $region10: #{conv_block_2d.1} parent=0 // pred_check
    _
  $region11: #{conv_block_2d.1} parent=0 // pred_check_branch
    %15 = sbr.rel (0) target = $region13
  $region12: #{conv_block_2d.1} parent=0 // pred_region
    _
  $region13: #{conv_block_2d.1} parent=0 // pred_fallthru
    _
  // Predicated region
  $region14: #{conv_block_2d.1} parent=0 // pred_check
    _
  $region15: #{conv_block_2d.1} parent=0 // pred_check_branch
    %17 = sbr.rel (0) target = $region17
  $region16: #{conv_block_2d.1} parent=0 // pred_region
    _
  $region17: #{conv_block_2d.1} parent=0 // pred_fallthru
    _
  // Predicated region
  $region18: #{conv_block_2d.1} parent=0 // pred_check
    _
  $region19: #{conv_block_2d.1} parent=0 // pred_check_branch
    %19 = sbr.rel (0) target = $region21
  $region20: #{conv_block_2d.1} parent=0 // pred_region
    _
  $region21: #{conv_block_2d.1} parent=0 // pred_fallthru
    _
  %v20 = vld [vmem:[%s1] sm:$0xff]
  %v21 = vld [vmem:[%s2] sm:$0xff]
  %v22 = vld [vmem:[%s0] sm:$0xff]
  %v23 = vld [vmem:[%s0 + $0x8] sm:$0xff]
  %v24 = vld [vmem:[%s0 + $0x10] sm:$0x1]
  %v25 = vld [vmem:[%s0 + $0x18] sm:$0x1]
  %27 = vset.pattern.permute.xlu0 0
  %28 = vperm.xlu0 %27, %v21
  %v29 = vpop.permute.xlu0 %28
  %vm31 = vcmask 72704
  %v33 = vsel %vm31, %v20, 0
  %vm35 = vcmask 1040384
  %v37 = vsel %vm35, %v24, 0
  %v40 = vsel %vm35, %v25, 0
  %42 = vmatpush.msra.mxu0 0.0
  %43 = vmatpush.msra.mxu0 0.0
  %44 = vmatpush.msra.mxu0 0.0
  %45 = vmatpush.msra.mxu0 0.0
  %46 = vmatpush.msra.mxu0 0.0
  %47 = vmatpush.msra.mxu0 0.0
  %48 = vmatpush.msra.mxu0 0.0
  %49 = vmatpush.msra.mxu0 0.0
  %50 = vmatpush.msra.mxu0 0.0
  %51 = vmatpush.msra.mxu0 0.0
  %52 = vmatpush.msra.mxu0 0.0
  %53 = vmatpush.msra.mxu0 0.0
  %54 = vmatpush.msra.mxu0 0.0
  %55 = vmatpush.msra.mxu0 0.0
  %56 = vmatpush.msra.mxu0 %v37
  %57 = vmatpush.msra.mxu0 %v22
  %58 = vmatmul.f32.gmra.mxu0 %v33
  %v59 = vpop.f32.mrf.mxu0
  %v60 = vadd.f32 %v29, %v59
  %61 = vdwg.mxu0
  %62 = vmatpush.msra.mxu0 0.0
  %63 = vmatpush.msra.mxu0 0.0
  %64 = vmatpush.msra.mxu0 0.0
  %65 = vmatpush.msra.mxu0 0.0
  %66 = vmatpush.msra.mxu0 0.0
  %67 = vmatpush.msra.mxu0 0.0
  %68 = vmatpush.msra.mxu0 0.0
  %69 = vmatpush.msra.mxu0 0.0
  %70 = vmatpush.msra.mxu0 0.0
  %71 = vmatpush.msra.mxu0 0.0
  %72 = vmatpush.msra.mxu0 0.0
  %73 = vmatpush.msra.mxu0 0.0
  %74 = vmatpush.msra.mxu0 0.0
  %75 = vmatpush.msra.mxu0 0.0
  %76 = vmatpush.msra.mxu0 %v40
  %77 = vmatpush.msra.mxu0 %v23
  %78 = vmatmul.f32.gmra.mxu0 %v33
  %v79 = vpop.f32.mrf.mxu0
  %v80 = vadd.f32 %v29, %v79
  %81 = vdwg.mxu0
  %vm82 = vcmask 556032
  %v83 = vsel %vm82, %v80, 0.0
  %v84 = vadd.f32 %v60, %v83
  %85 = vadd.xlane.f32.xlu0 %v84
  %v86 = vpop.xlane.xlu0 %85
  %v87 = vadd.f32 %v86, 0.0
  %s88 = scalar_lea.vmem %s0, 32
  %v89 = vld [vmem:[%s88] sm:$0xff]
  %v90 = vld [vmem:[%s88 + $0x8] sm:$0xff]
  %v91 = vld [vmem:[%s88 + $0x10] sm:$0x1]
  %v92 = vld [vmem:[%s88 + $0x18] sm:$0x1]
  %v94 = vsel %vm35, %v91, 0
  %v97 = vsel %vm35, %v92, 0
  %99 = vmatpush.msra.mxu0 0.0
  %100 = vmatpush.msra.mxu0 0.0
  %101 = vmatpush.msra.mxu0 0.0
  %102 = vmatpush.msra.mxu0 0.0
  %103 = vmatpush.msra.mxu0 0.0
  %104 = vmatpush.msra.mxu0 0.0
  %105 = vmatpush.msra.mxu0 0.0
  %106 = vmatpush.msra.mxu0 0.0
  %107 = vmatpush.msra.mxu0 0.0
  %108 = vmatpush.msra.mxu0 0.0
  %109 = vmatpush.msra.mxu0 0.0
  %110 = vmatpush.msra.mxu0 0.0
  %111 = vmatpush.msra.mxu0 0.0
  %112 = vmatpush.msra.mxu0 0.0
  %113 = vmatpush.msra.mxu0 %v94
  %114 = vmatpush.msra.mxu0 %v89
  %115 = vmatmul.f32.gmra.mxu0 %v33
  %v116 = vpop.f32.mrf.mxu0
  %v117 = vadd.f32 %v29, %v116
  %118 = vdwg.mxu0
  %119 = vmatpush.msra.mxu0 0.0
  %120 = vmatpush.msra.mxu0 0.0
  %121 = vmatpush.msra.mxu0 0.0
  %122 = vmatpush.msra.mxu0 0.0
  %123 = vmatpush.msra.mxu0 0.0
  %124 = vmatpush.msra.mxu0 0.0
  %125 = vmatpush.msra.mxu0 0.0
  %126 = vmatpush.msra.mxu0 0.0
  %127 = vmatpush.msra.mxu0 0.0
  %128 = vmatpush.msra.mxu0 0.0
  %129 = vmatpush.msra.mxu0 0.0
  %130 = vmatpush.msra.mxu0 0.0
  %131 = vmatpush.msra.mxu0 0.0
  %132 = vmatpush.msra.mxu0 0.0
  %133 = vmatpush.msra.mxu0 %v97
  %134 = vmatpush.msra.mxu0 %v90
  %135 = vmatmul.f32.gmra.mxu0 %v33
  %v136 = vpop.f32.mrf.mxu0
  %v137 = vadd.f32 %v29, %v136
  %138 = vdwg.mxu0
  %v139 = vsel %vm82, %v137, 0.0
  %v140 = vadd.f32 %v117, %v139
  %141 = vadd.xlane.f32.xlu0 %v140
  %v142 = vpop.xlane.xlu0 %141
  %v143 = vadd.f32 %v87, %v142
  %v144 = vmul.f32 %v143, 0.0025510204
  %v145 = vsub.f32 %v60, %v144
  %v146 = vsub.f32 %v80, %v144
  %v147 = vmul.f32 %v145, %v145
  %v148 = vmul.f32 %v146, %v146
  %v149 = vsel %vm82, %v148, 0.0
  %v150 = vadd.f32 %v147, %v149
  %151 = vadd.xlane.f32.xlu0 %v150
  %v152 = vpop.xlane.xlu0 %151
  %v153 = vadd.f32 %v152, 0.0
  %v154 = vsub.f32 %v117, %v144
  %v155 = vsub.f32 %v137, %v144
  %v156 = vmul.f32 %v154, %v154
  %v157 = vmul.f32 %v155, %v155
  %v158 = vsel %vm82, %v157, 0.0
  %v159 = vadd.f32 %v156, %v158
  %160 = vadd.xlane.f32.xlu0 %v159
  %v161 = vpop.xlane.xlu0 %160
  %v162 = vadd.f32 %v153, %v161
  %v163 = vmul.f32 %v162, 0.0025510204
  %v164 = vadd.f32 %v163, 1e-05
  %v165 = vrsqrt.pop %v164
  %v166 = vmul.f32 %v165, %v164
  %v167 = vmul.f32 %v166, %v165
  %v168 = vmul.f32 0.5, %v167
  %v169 = vsub.f32 1.5, %v168
  %v170 = vmul.f32 %v165, %v169
  %vm171 = vweird.f32 %v164
  %vm172 = vweird.f32 %v165
  %vm173 = vmor %vm171, %vm172
  %v174 = vsel %vm173, %v165, %v170
  %v175 = vld [vmem:[%s3] sm:$0xff]
  %v176 = vmul.f32 %v175, %v174
  %v177 = vld [vmem:[%s4] sm:$0xff]
  %v178 = vmul.f32 %v144, %v176
  %v179 = vsub.f32 %v177, %v178
  %181 = vset.pattern.permute.xlu0 0
  %182 = vperm.xlu0 %181, %v176
  %v183 = vpop.permute.xlu0 %182
  %v185 = vmul.f32 %v60, %v183
  %v186 = vmul.f32 %v80, %v183
  %188 = vset.pattern.permute.xlu0 0
  %189 = vperm.xlu0 %188, %v179
  %v190 = vpop.permute.xlu0 %189
  %v192 = vadd.f32 %v185, %v190
  %v193 = vadd.f32 %v186, %v190
  %194 = vst [vmem:[%s5] sm:$0xff] %v192
  %195 = vst.msk [vmem:[%s5 + $0x8] sm:$0xff] %vm82, %v193
  %v196 = vmul.f32 %v117, %v183
  %v197 = vmul.f32 %v137, %v183
  %v198 = vadd.f32 %v196, %v190
  %v199 = vadd.f32 %v197, %v190
  %s200 = scalar_lea.vmem %s5, 16
  %201 = vst [vmem:[%s200] sm:$0xff] %v198
  %202 = vst.msk [vmem:[%s200 + $0x8] sm:$0xff] %vm82, %v199
  // Predicated region
  $region22: #{conv_block_2d.1} parent=0 // pred_check
    _
  $region23: #{conv_block_2d.1} parent=0 // pred_check_branch
    %204 = sbr.rel (0) target = $region25
  $region24: #{conv_block_2d.1} parent=0 // pred_region
    _
  $region25: #{conv_block_2d.1} parent=0 // pred_fallthru
    _
  // Predicated region
  $region26: #{conv_block_2d.1} parent=0 // pred_check
    _
  $region27: #{conv_block_2d.1} parent=0 // pred_check_branch
    %206 = sbr.rel (0) target = $region29
  $region28: #{conv_block_2d.1} parent=0 // pred_region
    _
  $region29: #{conv_block_2d.1} parent=0 // pred_fallthru
    _

</llo_original>
